<compile_context>
chip_gen: v5e
topology: v5e:2x2
jax: 0.10.0
libtpu: 0.0.40
codegen_flags: <defaults>
</compile_context>

<pallas_src>
import functools
from typing import NamedTuple

import jax
import jax.numpy as jnp
from jax.experimental import pallas as pl
from jax.experimental.pallas import tpu as pltpu

_LANE = 128
_BF16_SUBLANE = 16  # bf16 packs 16 rows per vreg sublane group


def _round_up(n: int, m: int) -> int:
    return ((n + m - 1) // m) * m


def _num_parallel_cores() -> int:
    """2 grid shards for dual-TensorCore chips (v7x), else 1."""
    try:
        kind = jax.devices()[0].device_kind.lower()
    except Exception:
        return 1
    return 2 if ("v7" in kind or "7x" in kind) else 1


def _pick_batch_tile(batch: int, block_batch: int, num_parallel: int) -> int:
    """One big tile on single-TC chips; even split across TCs on v7x."""
    target = _round_up(max(1, pl.cdiv(batch, num_parallel)), _BF16_SUBLANE)
    cap = _round_up(max(block_batch, _BF16_SUBLANE), _BF16_SUBLANE)
    return max(_BF16_SUBLANE, min(cap, target))


# ----------------------------------------------------------------------------
# Kernel
# ----------------------------------------------------------------------------
def _actor_mlp_kernel(x_ref, w0_ref, wr_ref, b_ref, o_ref):
    """Fused MLP over one batch tile.

    x_ref:  (TB, in_dim)      f32   true-width activations (no lane padding)
    w0_ref: (in_dim, D)       bf16  first-layer weight (VMEM-resident)
    wr_ref: (L-1, D, D)       bf16  packed remaining weights (VMEM-resident)
    b_ref:  (L, 1, D)         f32   packed biases (VMEM-resident)
    o_ref:  (TB, D)           bf16  lane-dense output slab
    """
    n_layers = b_ref.shape[0]

    # Layer 0: consume x at its true feature width (K = in_dim).
    x = x_ref[...].astype(jnp.bfloat16)
    z = jnp.dot(x, w0_ref[...], preferred_element_type=jnp.float32) + b_ref[0]

    if n_layers == 1:
        o_ref[...] = jnp.tanh(z).astype(o_ref.dtype)
        return

    h = jnp.maximum(z, 0.0).astype(jnp.bfloat16)

    # Layers 1..L-1 (static unroll): 128x128 padded matmuls.
    for i in range(n_layers - 1):
        z = jnp.dot(h, wr_ref[i], preferred_element_type=jnp.float32) + b_ref[i + 1]
        if i < n_layers - 2:
            h = jnp.maximum(z, 0.0).astype(jnp.bfloat16)
        else:
            o_ref[...] = jnp.tanh(z).astype(o_ref.dtype)


# ----------------------------------------------------------------------------
# One-time parameter packing (hoisted out of the hot path)
# ----------------------------------------------------------------------------
class PackedActorParams(NamedTuple):
    w0: jax.Array      # (in_dim, D) bf16
    w_rest: jax.Array  # (max(L-1,1), D, D) bf16
    b: jax.Array       # (L, 1, D) f32
    in_dim: int
    out_dim: int


def pack_actor_params(params) -> PackedActorParams:
    """Pack (W (in,out), b (1,out)) f32 params into kernel slabs. Call ONCE.

    NOTE: weights are stored (in, out) — transposed w.r.t. PyTorch Linear's
    (out, in). Transpose real PyTorch weights before packing.
    """
    in_dim = params[0][0].shape[0]
    dims = [in_dim] + [w.shape[1] for w, _ in params]
    out_dim = dims[-1]
    n_layers = len(params)
    d = _round_up(max(dims[1:]), _LANE)  # padded width of all activations after L0

    w0 = jnp.zeros((in_dim, d), jnp.bfloat16)
    w0 = w0.at[:, : dims[1]].set(params[0][0].astype(jnp.bfloat16))

    wr = jnp.zeros((max(n_layers - 1, 1), d, d), jnp.bfloat16)
    for i, (w, _) in enumerate(params[1:]):
        ki, ni = w.shape
        wr = wr.at[i, :ki, :ni].set(w.astype(jnp.bfloat16))

    bp = jnp.zeros((n_layers, 1, d), jnp.float32)
    for i, (_, bi) in enumerate(params):
        bp = bp.at[i, 0, : bi.size].set(bi.reshape(-1).astype(jnp.float32))

    return PackedActorParams(w0=w0, w_rest=wr, b=bp, in_dim=in_dim, out_dim=out_dim)


# ----------------------------------------------------------------------------
# Forward
# ----------------------------------------------------------------------------
@functools.partial(
    jax.jit, static_argnames=("out_dim", "block_batch", "num_parallel")
)
def _actor_forward_jit(x, w0, w_rest, b, *, out_dim, block_batch, num_parallel):
    batch, in_dim = x.shape
    d = w0.shape[1]
    n_layers = b.shape[0]

    tb = _pick_batch_tile(batch, block_batch, num_parallel)
    batch_pad = _round_up(batch, tb)
    if batch_pad != batch:
        x = jnp.pad(x, ((0, batch_pad - batch), (0, 0)))
    grid = (batch_pad // tb,)

    flops = 2 * batch_pad * (in_dim * d + max(n_layers - 1, 0) * d * d)
    transcendentals = batch_pad * d  # tanh on the readout slab
    bytes_accessed = (
        batch_pad * in_dim * 4          # x (f32) read
        + w0.size * 2 + w_rest.size * 2  # weights (bf16)
        + b.size * 4                     # biases (f32)
        + batch_pad * d * 2              # output slab (bf16) write
    )

    out = pl.pallas_call(
        _actor_mlp_kernel,
        out_shape=jax.ShapeDtypeStruct((batch_pad, d), jnp.bfloat16),
        grid_spec=pltpu.PrefetchScalarGridSpec(
            num_scalar_prefetch=0,
            grid=grid,
            in_specs=[
                pl.BlockSpec((tb, in_dim), lambda i: (i, 0)),              # x tile
                pl.BlockSpec((in_dim, d), lambda i: (0, 0)),               # W0
                pl.BlockSpec((w_rest.shape[0], d, d), lambda i: (0, 0, 0)),  # packed W
                pl.BlockSpec((n_layers, 1, d), lambda i: (0, 0, 0)),       # packed b
            ],
            out_specs=pl.BlockSpec((tb, d), lambda i: (i, 0)),
        ),
        compiler_params=pltpu.CompilerParams(
            dimension_semantics=("parallel",),
        ),
        cost_estimate=pl.CostEstimate(
            flops=flops,
            transcendentals=transcendentals,
            bytes_accessed=bytes_accessed,
        ),
    )(x, w0, w_rest, b)

    return out[:batch, :out_dim].astype(jnp.float32)


def actor_forward(x, packed: PackedActorParams, *, block_batch=1024):
    """x: (batch, input_dim) f32; packed: output of pack_actor_params()."""
    return _actor_forward_jit(
        x,
        packed.w0,
        packed.w_rest,
        packed.b,
        out_dim=packed.out_dim,
        block_batch=block_batch,
        num_parallel=_num_parallel_cores(),
    )


# ----------------------------------------------------------------------------
# Parameter init + pure-JAX references
# ----------------------------------------------------------------------------
def init_actor_params(key, input_dim, hidden_dims, output_dim):
    """Deterministic init mimicking nn.Linear's U(-1/sqrt(fan_in), 1/sqrt(fan_in))."""
    sizes = [input_dim] + hidden_dims + [output_dim]
    params = []
    for fan_in, fan_out in zip(sizes[:-1], sizes[1:]):
        key, kw, kb = jax.random.split(key, 3)
        bound = 1.0 / jnp.sqrt(fan_in)
        # stored as (in, out) — transposed w.r.t. PyTorch's (out, in)
        w = jax.random.uniform(kw, (fan_in, fan_out), jnp.float32, -bound, bound)
        b = jax.random.uniform(kb, (1, fan_out), jnp.float32, -bound, bound)
        params.append((w, b))
    return params


def actor_forward_ref_f32(x, params):
    """Full-f32 pure-JAX reference (matches PyTorch up to bf16-at-MXU error)."""
    h = x
    for w, b in params[:-1]:
        h = jnp.maximum(h @ w + b.reshape(1, -1), 0.0)
    w, b = params[-1]
    return jnp.tanh(h @ w + b.reshape(1, -1))


def actor_forward_ref_mixed(x, params):
    """Pure-JAX reference matching the kernel's bf16-at-MXU / f32-elsewhere numerics."""
    h = x.astype(jnp.bfloat16)
    for li, (w, b) in enumerate(params):
        z = jnp.dot(h, w.astype(jnp.bfloat16), preferred_element_type=jnp.float32)
        z = z + b.reshape(1, -1).astype(jnp.float32)
        if li < len(params) - 1:
            h = jnp.maximum(z, 0.0).astype(jnp.bfloat16)
        else:
            return jnp.tanh(z)


if __name__ == "__main__":
    # Actor_Net(input_dim=16, hidden_dims=[32, 32], output_dim=8)
    input_dim = 16
    hidden_dims = [32, 32]
    output_dim = 8
    batch = 512

    key = jax.random.PRNGKey(0)
    key, kx = jax.random.split(key)
    x = jax.random.normal(kx, (batch, input_dim), dtype=jnp.float32)

    params = init_actor_params(key, input_dim, hidden_dims, output_dim)
    packed = pack_actor_params(params)          # one-time packing (not in hot path)

    out = actor_forward(x, packed)
    out = jax.block_until_ready(out)
    assert out.shape == (batch, output_dim)

    # Check vs a reference using the same bf16-at-dot recipe (output is bf16-rounded).
    ref_mixed = actor_forward_ref_mixed(x, params)
    assert jnp.allclose(out, ref_mixed, atol=1.5e-2), "mismatch vs mixed-precision reference"

    # Sanity check vs the full-f32 reference (tanh-bounded -> absolute tolerance).
    ref_f32 = actor_forward_ref_f32(x, params)
    assert jnp.allclose(out, ref_f32, atol=6e-2), "mismatch vs f32 reference"

    # TODO(synk): Adam optimizer and predict()'s numpy<->torch bridge are host-side
    # training utilities with no Pallas equivalent; only forward() is implemented.
    print("KERNEL_OK")
</pallas_src>

<mosaic_0001>
module attributes {stable_mosaic.version = 11 : i64} {
  func.func @_actor_mlp_kernel(%arg0: i32, %arg1: memref<512x16xf32, #tpu.memory_space<vmem>>, %arg2: memref<16x128xbf16, #tpu.memory_space<vmem>>, %arg3: memref<2x128x128xbf16, #tpu.memory_space<vmem>>, %arg4: memref<3x1x128xf32, #tpu.memory_space<vmem>>, %arg5: memref<512x128xbf16, #tpu.memory_space<vmem>>) attributes {dimension_semantics = [#tpu.dimension_semantics<parallel>], iteration_bounds = array<i64: 1>, scalar_prefetch = 0 : i64, scratch_operands = 0 : i64, tpu.core_type = #tpu.core_type<tc>, window_params = [{transform_indices = @transform_0, window_bounds = array<i64: 512, 16>}, {pipeline_mode = #tpu.pipeline_mode<synchronous>, transform_indices = @transform_1, window_bounds = array<i64: 16, 128>}, {pipeline_mode = #tpu.pipeline_mode<synchronous>, transform_indices = @transform_2, window_bounds = array<i64: 2, 128, 128>}, {pipeline_mode = #tpu.pipeline_mode<synchronous>, transform_indices = @transform_3, window_bounds = array<i64: 3, 1, 128>}, {transform_indices = @transform_4, window_bounds = array<i64: 512, 128>}]} {
    %c0 = arith.constant 0 : index
    %c0_0 = arith.constant 0 : index
    %0 = vector.load %arg1[%c0, %c0_0] : memref<512x16xf32, #tpu.memory_space<vmem>>, vector<512x16xf32>
    %1 = arith.truncf %0 : vector<512x16xf32> to vector<512x16xbf16>
    %c0_1 = arith.constant 0 : index
    %c0_2 = arith.constant 0 : index
    %2 = vector.load %arg2[%c0_1, %c0_2] : memref<16x128xbf16, #tpu.memory_space<vmem>>, vector<16x128xbf16>
    %cst = arith.constant dense<0.000000e+00> : vector<512x128xf32>
    %3 = tpu.matmul %1, %2, %cst {dimension_numbers = #tpu.dot_dimension_numbers<[1], [0], [0], [1], [0, 0, 1, 1], [], []>} : vector<512x16xbf16>, vector<16x128xbf16>, vector<512x128xf32> -> vector<512x128xf32>
    %c0_3 = arith.constant 0 : index
    %c0_4 = arith.constant 0 : index
    %c0_5 = arith.constant 0 : index
    %4 = vector.load %arg4[%c0_3, %c0_4, %c0_5] : memref<3x1x128xf32, #tpu.memory_space<vmem>>, vector<1x1x128xf32>
    %5 = vector.shape_cast %4 : vector<1x1x128xf32> to vector<1x128xf32>
    %6 = vector.broadcast %5 : vector<1x128xf32> to vector<512x128xf32>
    %7 = arith.addf %3, %6 : vector<512x128xf32>
    %cst_6 = arith.constant 0.000000e+00 : f32
    %8 = vector.broadcast %cst_6 : f32 to vector<512x128xf32>
    %9 = arith.maximumf %7, %8 : vector<512x128xf32>
    %10 = arith.truncf %9 : vector<512x128xf32> to vector<512x128xbf16>
    %c0_7 = arith.constant 0 : index
    %c0_8 = arith.constant 0 : index
    %c0_9 = arith.constant 0 : index
    %11 = vector.load %arg3[%c0_7, %c0_8, %c0_9] : memref<2x128x128xbf16, #tpu.memory_space<vmem>>, vector<1x128x128xbf16>
    %12 = vector.shape_cast %11 : vector<1x128x128xbf16> to vector<128x128xbf16>
    %cst_10 = arith.constant dense<0.000000e+00> : vector<512x128xf32>
    %13 = tpu.matmul %10, %12, %cst_10 {dimension_numbers = #tpu.dot_dimension_numbers<[1], [0], [0], [1], [0, 0, 1, 1], [], []>} : vector<512x128xbf16>, vector<128x128xbf16>, vector<512x128xf32> -> vector<512x128xf32>
    %c1 = arith.constant 1 : index
    %c0_11 = arith.constant 0 : index
    %c0_12 = arith.constant 0 : index
    %14 = vector.load %arg4[%c1, %c0_11, %c0_12] : memref<3x1x128xf32, #tpu.memory_space<vmem>>, vector<1x1x128xf32>
    %15 = vector.shape_cast %14 : vector<1x1x128xf32> to vector<1x128xf32>
    %16 = vector.broadcast %15 : vector<1x128xf32> to vector<512x128xf32>
    %17 = arith.addf %13, %16 : vector<512x128xf32>
    %cst_13 = arith.constant 0.000000e+00 : f32
    %18 = vector.broadcast %cst_13 : f32 to vector<512x128xf32>
    %19 = arith.maximumf %17, %18 : vector<512x128xf32>
    %20 = arith.truncf %19 : vector<512x128xf32> to vector<512x128xbf16>
    %c1_14 = arith.constant 1 : index
    %c0_15 = arith.constant 0 : index
    %c0_16 = arith.constant 0 : index
    %21 = vector.load %arg3[%c1_14, %c0_15, %c0_16] : memref<2x128x128xbf16, #tpu.memory_space<vmem>>, vector<1x128x128xbf16>
    %22 = vector.shape_cast %21 : vector<1x128x128xbf16> to vector<128x128xbf16>
    %cst_17 = arith.constant dense<0.000000e+00> : vector<512x128xf32>
    %23 = tpu.matmul %20, %22, %cst_17 {dimension_numbers = #tpu.dot_dimension_numbers<[1], [0], [0], [1], [0, 0, 1, 1], [], []>} : vector<512x128xbf16>, vector<128x128xbf16>, vector<512x128xf32> -> vector<512x128xf32>
    %c2 = arith.constant 2 : index
    %c0_18 = arith.constant 0 : index
    %c0_19 = arith.constant 0 : index
    %24 = vector.load %arg4[%c2, %c0_18, %c0_19] : memref<3x1x128xf32, #tpu.memory_space<vmem>>, vector<1x1x128xf32>
    %25 = vector.shape_cast %24 : vector<1x1x128xf32> to vector<1x128xf32>
    %26 = vector.broadcast %25 : vector<1x128xf32> to vector<512x128xf32>
    %27 = arith.addf %23, %26 : vector<512x128xf32>
    %28 = math.tanh %27 : vector<512x128xf32>
    %29 = arith.truncf %28 : vector<512x128xf32> to vector<512x128xbf16>
    %c0_20 = arith.constant 0 : index
    %c0_21 = arith.constant 0 : index
    %30 = vector.load %arg5[%c0_20, %c0_21] : memref<512x128xbf16, #tpu.memory_space<vmem>>, vector<512x128xbf16>
    tpu.vector_store %arg5[%c0_20, %c0_21], %29 {strides = array<i32>} : memref<512x128xbf16, #tpu.memory_space<vmem>>, vector<512x128xbf16>,
    return
  }
  func.func @transform_0(%arg0: i32) -> (i32, i32) {
    %c0_i32 = arith.constant 0 : i32
    %c0_i32_0 = arith.constant 0 : i32
    return %arg0, %c0_i32 : i32, i32
  }
  func.func @transform_1(%arg0: i32) -> (i32, i32) {
    %c0_i32 = arith.constant 0 : i32
    %c0_i32_0 = arith.constant 0 : i32
    %c0_i32_1 = arith.constant 0 : i32
    return %c0_i32, %c0_i32_0 : i32, i32
  }
  func.func @transform_2(%arg0: i32) -> (i32, i32, i32) {
    %c0_i32 = arith.constant 0 : i32
    %c0_i32_0 = arith.constant 0 : i32
    %c0_i32_1 = arith.constant 0 : i32
    %c0_i32_2 = arith.constant 0 : i32
    return %c0_i32, %c0_i32_0, %c0_i32_1 : i32, i32, i32
  }
  func.func @transform_3(%arg0: i32) -> (i32, i32, i32) {
    %c0_i32 = arith.constant 0 : i32
    %c0_i32_0 = arith.constant 0 : i32
    %c0_i32_1 = arith.constant 0 : i32
    %c0_i32_2 = arith.constant 0 : i32
    return %c0_i32, %c0_i32_0, %c0_i32_1 : i32, i32, i32
  }
  func.func @transform_4(%arg0: i32) -> (i32, i32) {
    %c0_i32 = arith.constant 0 : i32
    %c0_i32_0 = arith.constant 0 : i32
    return %arg0, %c0_i32 : i32, i32
  }
}

</mosaic_0001>

<llo_original>
// kernel: _actor_forward_jit.1
$region0: #{_actor_forward_jit.1}
  #allocation0 [shape = 'u32[]', space=smem, size = 0x4, offset = 0x4, fixed_abs, tag = 'smem constant byte address 0x4 - core index']
  #allocation1 [shape = 'u32[72,128]{1,0:T(1,128)}', space=vmem, size = 0x9000, scoped, tag = 'internal scratch']
  %s0 = inlined_call_operand.vmem [shape: f32[512,16], index: 0, kind: input, shape index: {}]
  %s1 = inlined_call_operand.vmem [shape: bf16[16,128], index: 1, kind: input, shape index: {}]
  %s2 = inlined_call_operand.vmem [shape: bf16[2,128,128], index: 2, kind: input, shape index: {}]
  %s3 = inlined_call_operand.vmem [shape: f32[3,1,128], index: 3, kind: input, shape index: {}]
  %s4 = inlined_call_operand.vmem [shape: bf16[512,128], index: 4, kind: output, shape index: {}]
  %s5 = sld [smem:[#allocation0]]
  $region26: #{_actor_forward_jit.1} parent=0
    _
  %s7 = ssub.s32 1, %s5
  %s8 = scalar_select 0, %s7, %s5
  // Predicated region
  $region2: #{_actor_forward_jit.1} parent=0 // pred_check
    _
  $region3: #{_actor_forward_jit.1} parent=0 // pred_check_branch
    %10 = sbr.rel (0) target = $region5
  $region4: #{_actor_forward_jit.1} parent=0 // pred_region
    _
  $region5: #{_actor_forward_jit.1} parent=0 // pred_fallthru
    _
  // Predicated region
  $region6: #{_actor_forward_jit.1} parent=0 // pred_check
    _
  $region7: #{_actor_forward_jit.1} parent=0 // pred_check_branch
    %12 = sbr.rel (0) target = $region9
  $region8: #{_actor_forward_jit.1} parent=0 // pred_region
    _
  $region9: #{_actor_forward_jit.1} parent=0 // pred_fallthru
    _
  // Predicated region
  $region10: #{_actor_forward_jit.1} parent=0 // pred_check
    _
  $region11: #{_actor_forward_jit.1} parent=0 // pred_check_branch
    %14 = sbr.rel (0) target = $region13
  $region12: #{_actor_forward_jit.1} parent=0 // pred_region
    _
  $region13: #{_actor_forward_jit.1} parent=0 // pred_fallthru
    _
  // Predicated region
  $region14: #{_actor_forward_jit.1} parent=0 // pred_check
    _
  $region15: #{_actor_forward_jit.1} parent=0 // pred_check_branch
    %16 = sbr.rel (0) target = $region17
  $region16: #{_actor_forward_jit.1} parent=0 // pred_region
    _
  $region17: #{_actor_forward_jit.1} parent=0 // pred_fallthru
    _
  %v18 = vld [vmem:[%s0] sm:$0xff]
  %v19 = vld [vmem:[%s0 + $0x8] sm:$0xff]
  %v20 = vld [vmem:[%s0 + $0x10] sm:$0xff]
  %v21 = vld [vmem:[%s0 + $0x18] sm:$0xff]
  %v22 = vld [vmem:[%s0 + $0x20] sm:$0xff]
  %v23 = vld [vmem:[%s0 + $0x28] sm:$0xff]
  %v24 = vld [vmem:[%s0 + $0x30] sm:$0xff]
  %v25 = vld [vmem:[%s0 + $0x38] sm:$0xff]
  %v26 = vld [vmem:[%s0 + $0x40] sm:$0xff]
  %v27 = vld [vmem:[%s0 + $0x48] sm:$0xff]
  %v28 = vld [vmem:[%s0 + $0x50] sm:$0xff]
  %v29 = vld [vmem:[%s0 + $0x58] sm:$0xff]
  %v30 = vld [vmem:[%s0 + $0x60] sm:$0xff]
  %v31 = vld [vmem:[%s0 + $0x68] sm:$0xff]
  %v32 = vld [vmem:[%s0 + $0x70] sm:$0xff]
  %v33 = vld [vmem:[%s0 + $0x78] sm:$0xff]
  %v34 = vld [vmem:[%s0 + $0x80] sm:$0xff]
  %v35 = vld [vmem:[%s0 + $0x88] sm:$0xff]
  %v36 = vld [vmem:[%s0 + $0x90] sm:$0xff]
  %v37 = vld [vmem:[%s0 + $0x98] sm:$0xff]
  %v38 = vld [vmem:[%s0 + $0xa0] sm:$0xff]
  %v39 = vld [vmem:[%s0 + $0xa8] sm:$0xff]
  %v40 = vld [vmem:[%s0 + $0xb0] sm:$0xff]
  %v41 = vld [vmem:[%s0 + $0xb8] sm:$0xff]
  %v42 = vld [vmem:[%s0 + $0xc0] sm:$0xff]
  %v43 = vld [vmem:[%s0 + $0xc8] sm:$0xff]
  %v44 = vld [vmem:[%s0 + $0xd0] sm:$0xff]
  %v45 = vld [vmem:[%s0 + $0xd8] sm:$0xff]
  %v46 = vld [vmem:[%s0 + $0xe0] sm:$0xff]
  %v47 = vld [vmem:[%s0 + $0xe8] sm:$0xff]
  %v48 = vld [vmem:[%s0 + $0xf0] sm:$0xff]
  %v49 = vld [vmem:[%s0 + $0xf8] sm:$0xff]
  %v50 = vld [vmem:[%s0 + $0x100] sm:$0xff]
  %v51 = vld [vmem:[%s0 + $0x108] sm:$0xff]
  %v52 = vld [vmem:[%s0 + $0x110] sm:$0xff]
  %v53 = vld [vmem:[%s0 + $0x118] sm:$0xff]
  %v54 = vld [vmem:[%s0 + $0x120] sm:$0xff]
  %v55 = vld [vmem:[%s0 + $0x128] sm:$0xff]
  %v56 = vld [vmem:[%s0 + $0x130] sm:$0xff]
  %v57 = vld [vmem:[%s0 + $0x138] sm:$0xff]
  %v58 = vld [vmem:[%s0 + $0x140] sm:$0xff]
  %v59 = vld [vmem:[%s0 + $0x148] sm:$0xff]
  %v60 = vld [vmem:[%s0 + $0x150] sm:$0xff]
  %v61 = vld [vmem:[%s0 + $0x158] sm:$0xff]
  %v62 = vld [vmem:[%s0 + $0x160] sm:$0xff]
  %v63 = vld [vmem:[%s0 + $0x168] sm:$0xff]
  %v64 = vld [vmem:[%s0 + $0x170] sm:$0xff]
  %v65 = vld [vmem:[%s0 + $0x178] sm:$0xff]
  %v66 = vld [vmem:[%s0 + $0x180] sm:$0xff]
  %v67 = vld [vmem:[%s0 + $0x188] sm:$0xff]
  %v68 = vld [vmem:[%s0 + $0x190] sm:$0xff]
  %v69 = vld [vmem:[%s0 + $0x198] sm:$0xff]
  %v70 = vld [vmem:[%s0 + $0x1a0] sm:$0xff]
  %v71 = vld [vmem:[%s0 + $0x1a8] sm:$0xff]
  %v72 = vld [vmem:[%s0 + $0x1b0] sm:$0xff]
  %v73 = vld [vmem:[%s0 + $0x1b8] sm:$0xff]
  %v74 = vld [vmem:[%s0 + $0x1c0] sm:$0xff]
  %v75 = vld [vmem:[%s0 + $0x1c8] sm:$0xff]
  %v76 = vld [vmem:[%s0 + $0x1d0] sm:$0xff]
  %v77 = vld [vmem:[%s0 + $0x1d8] sm:$0xff]
  %v78 = vld [vmem:[%s0 + $0x1e0] sm:$0xff]
  %v79 = vld [vmem:[%s0 + $0x1e8] sm:$0xff]
  %v80 = vld [vmem:[%s0 + $0x1f0] sm:$0xff]
  %v81 = vld [vmem:[%s0 + $0x1f8] sm:$0xff]
  %v82 = vpack.c.bf16 %v19, %v18
  %v83 = vpack.c.bf16 %v21, %v20
  %v84 = vpack.c.bf16 %v23, %v22
  %v85 = vpack.c.bf16 %v25, %v24
  %v86 = vpack.c.bf16 %v27, %v26
  %v87 = vpack.c.bf16 %v29, %v28
  %v88 = vpack.c.bf16 %v31, %v30
  %v89 = vpack.c.bf16 %v33, %v32
  %v90 = vpack.c.bf16 %v35, %v34
  %v91 = vpack.c.bf16 %v37, %v36
  %v92 = vpack.c.bf16 %v39, %v38
  %v93 = vpack.c.bf16 %v41, %v40
  %v94 = vpack.c.bf16 %v43, %v42
  %v95 = vpack.c.bf16 %v45, %v44
  %v96 = vpack.c.bf16 %v47, %v46
  %v97 = vpack.c.bf16 %v49, %v48
  %v98 = vpack.c.bf16 %v51, %v50
  %v99 = vpack.c.bf16 %v53, %v52
  %v100 = vpack.c.bf16 %v55, %v54
  %v101 = vpack.c.bf16 %v57, %v56
  %v102 = vpack.c.bf16 %v59, %v58
  %v103 = vpack.c.bf16 %v61, %v60
  %v104 = vpack.c.bf16 %v63, %v62
  %v105 = vpack.c.bf16 %v65, %v64
  %v106 = vpack.c.bf16 %v67, %v66
  %v107 = vpack.c.bf16 %v69, %v68
  %v108 = vpack.c.bf16 %v71, %v70
  %v109 = vpack.c.bf16 %v73, %v72
  %v110 = vpack.c.bf16 %v75, %v74
  %v111 = vpack.c.bf16 %v77, %v76
  %v112 = vpack.c.bf16 %v79, %v78
  %v113 = vpack.c.bf16 %v81, %v80
  %v114 = vld [vmem:[%s1] sm:$0xf]
  %v115 = vld [vmem:[%s1 + $0x4] sm:$0xf]
  %v116 = vld [vmem:[%s3] sm:$0x1]
  %v118 = vperm.slane %v116, 0
  %v122 = vunpack.c.l.b16 %v114
  %v123 = vunpack.c.l.b16 %v115
  %v124 = vpack.c.b16 %v123, %v122
  %vm126 = vcmask 130048
  %v128 = vsel %vm126, %v82, 0
  %v131 = vsel %vm126, %v83, 0
  %v134 = vsel %vm126, %v84, 0
  %v137 = vsel %vm126, %v85, 0
  %v140 = vsel %vm126, %v86, 0
  %v143 = vsel %vm126, %v87, 0
  %v146 = vsel %vm126, %v88, 0
  %v149 = vsel %vm126, %v89, 0
  %v152 = vsel %vm126, %v90, 0
  %v155 = vsel %vm126, %v91, 0
  %v158 = vsel %vm126, %v92, 0
  %v161 = vsel %vm126, %v93, 0
  %v164 = vsel %vm126, %v94, 0
  %v167 = vsel %vm126, %v95, 0
  %v170 = vsel %vm126, %v96, 0
  %v173 = vsel %vm126, %v97, 0
  %v176 = vsel %vm126, %v98, 0
  %v179 = vsel %vm126, %v99, 0
  %v182 = vsel %vm126, %v100, 0
  %v185 = vsel %vm126, %v101, 0
  %v188 = vsel %vm126, %v102, 0
  %v191 = vsel %vm126, %v103, 0
  %v194 = vsel %vm126, %v104, 0
  %v197 = vsel %vm126, %v105, 0
  %v200 = vsel %vm126, %v106, 0
  %v203 = vsel %vm126, %v107, 0
  %v206 = vsel %vm126, %v108, 0
  %v209 = vsel %vm126, %v109, 0
  %v212 = vsel %vm126, %v110, 0
  %v215 = vsel %vm126, %v111, 0
  %v218 = vsel %vm126, %v112, 0
  %v221 = vsel %vm126, %v113, 0
  %223 = vmatpush.bf16.msra.mxu0 0
  %224 = vmatpush.bf16.msra.mxu0 0
  %225 = vmatpush.bf16.msra.mxu0 0
  %226 = vmatpush.bf16.msra.mxu0 0
  %227 = vmatpush.bf16.msra.mxu0 0
  %228 = vmatpush.bf16.msra.mxu0 0
  %229 = vmatpush.bf16.msra.mxu0 0
  %230 = vmatpush.bf16.msra.mxu0 %v124
  %231 = vmatmul.bf16.gmra.mxu0 %v128
  %v232 = vpop.f32.mrf.mxu0
  %v233 = vadd.f32 %v118, %v232
  %v234 = vpop.f32.mrf.mxu0
  %v235 = vadd.f32 %v118, %v234
  %236 = vmatmul.bf16.gmra.mxu0 %v131
  %v237 = vpop.f32.mrf.mxu0
  %v238 = vadd.f32 %v118, %v237
  %v239 = vpop.f32.mrf.mxu0
  %v240 = vadd.f32 %v118, %v239
  %241 = vmatmul.bf16.gmra.mxu0 %v134
  %v242 = vpop.f32.mrf.mxu0
  %v243 = vadd.f32 %v118, %v242
  %v244 = vpop.f32.mrf.mxu0
  %v245 = vadd.f32 %v118, %v244
  %246 = vmatmul.bf16.gmra.mxu0 %v137
  %v247 = vpop.f32.mrf.mxu0
  %v248 = vadd.f32 %v118, %v247
  %v249 = vpop.f32.mrf.mxu0
  %v250 = vadd.f32 %v118, %v249
  %251 = vmatmul.bf16.gmra.mxu0 %v140
  %v252 = vpop.f32.mrf.mxu0
  %v253 = vadd.f32 %v118, %v252
  %v254 = vpop.f32.mrf.mxu0
  %v255 = vadd.f32 %v118, %v254
  %256 = vmatmul.bf16.gmra.mxu0 %v143
  %v257 = vpop.f32.mrf.mxu0
  %v258 = vadd.f32 %v118, %v257
  %v259 = vpop.f32.mrf.mxu0
  %v260 = vadd.f32 %v118, %v259
  %261 = vmatmul.bf16.gmra.mxu0 %v146
  %v262 = vpop.f32.mrf.mxu0
  %v263 = vadd.f32 %v118, %v262
  %v264 = vpop.f32.mrf.mxu0
  %v265 = vadd.f32 %v118, %v264
  %266 = vmatmul.bf16.gmra.mxu0 %v149
  %v267 = vpop.f32.mrf.mxu0
  %v268 = vadd.f32 %v118, %v267
  %v269 = vpop.f32.mrf.mxu0
  %v270 = vadd.f32 %v118, %v269
  %271 = vmatmul.bf16.gmra.mxu0 %v152
  %v272 = vpop.f32.mrf.mxu0
  %v273 = vadd.f32 %v118, %v272
  %v274 = vpop.f32.mrf.mxu0
  %v275 = vadd.f32 %v118, %v274
  %276 = vmatmul.bf16.gmra.mxu0 %v155
  %v277 = vpop.f32.mrf.mxu0
  %v278 = vadd.f32 %v118, %v277
  %v279 = vpop.f32.mrf.mxu0
  %v280 = vadd.f32 %v118, %v279
  %281 = vmatmul.bf16.gmra.mxu0 %v158
  %v282 = vpop.f32.mrf.mxu0
  %v283 = vadd.f32 %v118, %v282
  %v284 = vpop.f32.mrf.mxu0
  %v285 = vadd.f32 %v118, %v284
  %286 = vmatmul.bf16.gmra.mxu0 %v161
  %v287 = vpop.f32.mrf.mxu0
  %v288 = vadd.f32 %v118, %v287
  %v289 = vpop.f32.mrf.mxu0
  %v290 = vadd.f32 %v118, %v289
  %291 = vmatmul.bf16.gmra.mxu0 %v164
  %v292 = vpop.f32.mrf.mxu0
  %v293 = vadd.f32 %v118, %v292
  %v294 = vpop.f32.mrf.mxu0
  %v295 = vadd.f32 %v118, %v294
  %296 = vmatmul.bf16.gmra.mxu0 %v167
  %v297 = vpop.f32.mrf.mxu0
  %v298 = vadd.f32 %v118, %v297
  %v299 = vpop.f32.mrf.mxu0
  %v300 = vadd.f32 %v118, %v299
  %301 = vmatmul.bf16.gmra.mxu0 %v170
  %v302 = vpop.f32.mrf.mxu0
  %v303 = vadd.f32 %v118, %v302
  %v304 = vpop.f32.mrf.mxu0
  %v305 = vadd.f32 %v118, %v304
  %306 = vmatmul.bf16.gmra.mxu0 %v173
  %v307 = vpop.f32.mrf.mxu0
  %v308 = vadd.f32 %v118, %v307
  %v309 = vpop.f32.mrf.mxu0
  %v310 = vadd.f32 %v118, %v309
  %311 = vmatmul.bf16.gmra.mxu0 %v176
  %v312 = vpop.f32.mrf.mxu0
  %v313 = vadd.f32 %v118, %v312
  %v314 = vpop.f32.mrf.mxu0
  %v315 = vadd.f32 %v118, %v314
  %316 = vmatmul.bf16.gmra.mxu0 %v179
  %v317 = vpop.f32.mrf.mxu0
  %v318 = vadd.f32 %v118, %v317
  %v319 = vpop.f32.mrf.mxu0
  %v320 = vadd.f32 %v118, %v319
  %321 = vmatmul.bf16.gmra.mxu0 %v182
  %v322 = vpop.f32.mrf.mxu0
  %v323 = vadd.f32 %v118, %v322
  %v324 = vpop.f32.mrf.mxu0
  %v325 = vadd.f32 %v118, %v324
  %326 = vmatmul.bf16.gmra.mxu0 %v185
  %v327 = vpop.f32.mrf.mxu0
  %v328 = vadd.f32 %v118, %v327
  %v329 = vpop.f32.mrf.mxu0
  %v330 = vadd.f32 %v118, %v329
  %331 = vmatmul.bf16.gmra.mxu0 %v188
  %v332 = vpop.f32.mrf.mxu0
  %v333 = vadd.f32 %v118, %v332
  %v334 = vpop.f32.mrf.mxu0
  %v335 = vadd.f32 %v118, %v334
  %336 = vmatmul.bf16.gmra.mxu0 %v191
  %v337 = vpop.f32.mrf.mxu0
  %v338 = vadd.f32 %v118, %v337
  %v339 = vpop.f32.mrf.mxu0
  %v340 = vadd.f32 %v118, %v339
  %341 = vmatmul.bf16.gmra.mxu0 %v194
  %v342 = vpop.f32.mrf.mxu0
  %v343 = vadd.f32 %v118, %v342
  %v344 = vpop.f32.mrf.mxu0
  %v345 = vadd.f32 %v118, %v344
  %346 = vmatmul.bf16.gmra.mxu0 %v197
  %v347 = vpop.f32.mrf.mxu0
  %v348 = vadd.f32 %v118, %v347
  %v349 = vpop.f32.mrf.mxu0
  %v350 = vadd.f32 %v118, %v349
  %351 = vmatmul.bf16.gmra.mxu0 %v200
  %v352 = vpop.f32.mrf.mxu0
  %v353 = vadd.f32 %v118, %v352
  %v354 = vpop.f32.mrf.mxu0
  %v355 = vadd.f32 %v118, %v354
  %356 = vmatmul.bf16.gmra.mxu0 %v203
  %v357 = vpop.f32.mrf.mxu0
  %v358 = vadd.f32 %v118, %v357
  %v359 = vpop.f32.mrf.mxu0
  %v360 = vadd.f32 %v118, %v359
  %361 = vmatmul.bf16.gmra.mxu0 %v206
  %v362 = vpop.f32.mrf.mxu0
  %v363 = vadd.f32 %v118, %v362
  %v364 = vpop.f32.mrf.mxu0
  %v365 = vadd.f32 %v118, %v364
  %366 = vmatmul.bf16.gmra.mxu0 %v209
  %v367 = vpop.f32.mrf.mxu0
  %v368 = vadd.f32 %v118, %v367
  %v369 = vpop.f32.mrf.mxu0
  %v370 = vadd.f32 %v118, %v369
  %371 = vmatmul.bf16.gmra.mxu0 %v212
  %v372 = vpop.f32.mrf.mxu0
  %v373 = vadd.f32 %v118, %v372
  %v374 = vpop.f32.mrf.mxu0
  %v375 = vadd.f32 %v118, %v374
  %376 = vmatmul.bf16.gmra.mxu0 %v215
  %v377 = vpop.f32.mrf.mxu0
  %v378 = vadd.f32 %v118, %v377
  %v379 = vpop.f32.mrf.mxu0
  %v380 = vadd.f32 %v118, %v379
  %381 = vmatmul.bf16.gmra.mxu0 %v218
  %v382 = vpop.f32.mrf.mxu0
  %v383 = vadd.f32 %v118, %v382
  %v384 = vpop.f32.mrf.mxu0
  %v385 = vadd.f32 %v118, %v384
  %386 = vmatmul.bf16.gmra.mxu0 %v221
  %v387 = vpop.f32.mrf.mxu0
  %v388 = vadd.f32 %v118, %v387
  %v389 = vpop.f32.mrf.mxu0
  %v390 = vadd.f32 %v118, %v389
  %391 = vdwg.mxu0
  %v392 = vmax.f32 %v233, 0.0
  %v393 = vmax.f32 %v235, 0.0
  %v394 = vmax.f32 %v238, 0.0
  %v395 = vmax.f32 %v240, 0.0
  %v396 = vmax.f32 %v243, 0.0
  %v397 = vmax.f32 %v245, 0.0
  %v398 = vmax.f32 %v248, 0.0
  %v399 = vmax.f32 %v250, 0.0
  %v400 = vmax.f32 %v253, 0.0
  %v401 = vmax.f32 %v255, 0.0
  %v402 = vmax.f32 %v258, 0.0
  %v403 = vmax.f32 %v260, 0.0
  %v404 = vmax.f32 %v263, 0.0
  %v405 = vmax.f32 %v265, 0.0
  %v406 = vmax.f32 %v268, 0.0
  %v407 = vmax.f32 %v270, 0.0
  %v408 = vmax.f32 %v273, 0.0
  %v409 = vmax.f32 %v275, 0.0
  %v410 = vmax.f32 %v278, 0.0
  %v411 = vmax.f32 %v280, 0.0
  %v412 = vmax.f32 %v283, 0.0
  %v413 = vmax.f32 %v285, 0.0
  %v414 = vmax.f32 %v288, 0.0
  %v415 = vmax.f32 %v290, 0.0
  %v416 = vmax.f32 %v293, 0.0
  %v417 = vmax.f32 %v295, 0.0
  %v418 = vmax.f32 %v298, 0.0
  %v419 = vmax.f32 %v300, 0.0
  %v420 = vmax.f32 %v303, 0.0
  %v421 = vmax.f32 %v305, 0.0
  %v422 = vmax.f32 %v308, 0.0
  %v423 = vmax.f32 %v310, 0.0
  %v424 = vmax.f32 %v313, 0.0
  %v425 = vmax.f32 %v315, 0.0
  %v426 = vmax.f32 %v318, 0.0
  %v427 = vmax.f32 %v320, 0.0
  %v428 = vmax.f32 %v323, 0.0
  %v429 = vmax.f32 %v325, 0.0
  %v430 = vmax.f32 %v328, 0.0
  %v431 = vmax.f32 %v330, 0.0
  %v432 = vmax.f32 %v333, 0.0
  %v433 = vmax.f32 %v335, 0.0
  %v434 = vmax.f32 %v338, 0.0
  %v435 = vmax.f32 %v340, 0.0
  %v436 = vmax.f32 %v343, 0.0
  %v437 = vmax.f32 %v345, 0.0
  %v438 = vmax.f32 %v348, 0.0
  %v439 = vmax.f32 %v350, 0.0
  %v440 = vmax.f32 %v353, 0.0
  %v441 = vmax.f32 %v355, 0.0
  %v442 = vmax.f32 %v358, 0.0
  %v443 = vmax.f32 %v360, 0.0
  %v444 = vmax.f32 %v363, 0.0
  %v445 = vmax.f32 %v365, 0.0
  %v446 = vmax.f32 %v368, 0.0
  %v447 = vmax.f32 %v370, 0.0
  %v448 = vmax.f32 %v373, 0.0
  %v449 = vmax.f32 %v375, 0.0
  %v450 = vmax.f32 %v378, 0.0
  %v451 = vmax.f32 %v380, 0.0
  %v452 = vmax.f32 %v383, 0.0
  %v453 = vmax.f32 %v385, 0.0
  %v454 = vmax.f32 %v388, 0.0
  %v455 = vmax.f32 %v390, 0.0
  %v456 = vpack.c.bf16 %v393, %v392
  %v457 = vpack.c.bf16 %v395, %v394
  %v458 = vpack.c.bf16 %v397, %v396
  %v459 = vpack.c.bf16 %v399, %v398
  %v460 = vpack.c.bf16 %v401, %v400
  %v461 = vpack.c.bf16 %v403, %v402
  %v462 = vpack.c.bf16 %v405, %v404
  %v463 = vpack.c.bf16 %v407, %v406
  %v464 = vpack.c.bf16 %v409, %v408
  %v465 = vpack.c.bf16 %v411, %v410
  %v466 = vpack.c.bf16 %v413, %v412
  %v467 = vpack.c.bf16 %v415, %v414
  %v468 = vpack.c.bf16 %v417, %v416
  %v469 = vpack.c.bf16 %v419, %v418
  %v470 = vpack.c.bf16 %v421, %v420
  %v471 = vpack.c.bf16 %v423, %v422
  %v472 = vpack.c.bf16 %v425, %v424
  %v473 = vpack.c.bf16 %v427, %v426
  %v474 = vpack.c.bf16 %v429, %v428
  %v475 = vpack.c.bf16 %v431, %v430
  %v476 = vpack.c.bf16 %v433, %v432
  %v477 = vpack.c.bf16 %v435, %v434
  %v478 = vpack.c.bf16 %v437, %v436
  %v479 = vpack.c.bf16 %v439, %v438
  %v480 = vpack.c.bf16 %v441, %v440
  %v481 = vpack.c.bf16 %v443, %v442
  %v482 = vpack.c.bf16 %v445, %v444
  %v483 = vpack.c.bf16 %v447, %v446
  %v484 = vpack.c.bf16 %v449, %v448
  %v485 = vpack.c.bf16 %v451, %v450
  %v486 = vpack.c.bf16 %v453, %v452
  %v487 = vpack.c.bf16 %v455, %v454
  %v488 = vld [vmem:[%s2] sm:$0xf]
  %v489 = vld [vmem:[%s2 + $0x4] sm:$0xf]
  %v490 = vld [vmem:[%s2 + $0x8] sm:$0xf]
  %v491 = vld [vmem:[%s2 + $0xc] sm:$0xf]
  %v492 = vld [vmem:[%s2 + $0x10] sm:$0xf]
  %v493 = vld [vmem:[%s2 + $0x14] sm:$0xf]
  %v494 = vld [vmem:[%s2 + $0x18] sm:$0xf]
  %v495 = vld [vmem:[%s2 + $0x1c] sm:$0xf]
  %v496 = vld [vmem:[%s2 + $0x20] sm:$0xf]
  %v497 = vld [vmem:[%s2 + $0x24] sm:$0xf]
  %v498 = vld [vmem:[%s2 + $0x28] sm:$0xf]
  %v499 = vld [vmem:[%s2 + $0x2c] sm:$0xf]
  %v500 = vld [vmem:[%s2 + $0x30] sm:$0xf]
  %v501 = vld [vmem:[%s2 + $0x34] sm:$0xf]
  %v502 = vld [vmem:[%s2 + $0x38] sm:$0xf]
  %v503 = vld [vmem:[%s2 + $0x3c] sm:$0xf]
  %s504 = scalar_lea.vmem %s3, 1
  %v505 = vld [vmem:[%s504] sm:$0x1]
  %v507 = vperm.slane %v505, 0
  %v525 = vunpack.c.l.b16 %v488
  %v526 = vunpack.c.l.b16 %v489
  %v527 = vunpack.c.l.b16 %v490
  %v528 = vunpack.c.l.b16 %v491
  %v529 = vunpack.c.l.b16 %v492
  %v530 = vunpack.c.l.b16 %v493
  %v531 = vunpack.c.l.b16 %v494
  %v532 = vunpack.c.l.b16 %v495
  %v533 = vunpack.c.l.b16 %v496
  %v534 = vunpack.c.l.b16 %v497
  %v535 = vunpack.c.l.b16 %v498
  %v536 = vunpack.c.l.b16 %v499
  %v537 = vunpack.c.l.b16 %v500
  %v538 = vunpack.c.l.b16 %v501
  %v539 = vunpack.c.l.b16 %v502
  %v540 = vunpack.c.l.b16 %v503
  %v541 = vpack.c.b16 %v526, %v525
  %v542 = vpack.c.b16 %v528, %v527
  %v543 = vpack.c.b16 %v530, %v529
  %v544 = vpack.c.b16 %v532, %v531
  %v545 = vpack.c.b16 %v534, %v533
  %v546 = vpack.c.b16 %v536, %v535
  %v547 = vpack.c.b16 %v538, %v537
  %v548 = vpack.c.b16 %v540, %v539
  %557 = vmatpush.bf16.msra.mxu0 %v548
  %558 = vmatpush.bf16.msra.mxu0 %v547
  %559 = vmatpush.bf16.msra.mxu0 %v546
  %560 = vmatpush.bf16.msra.mxu0 %v545
  %561 = vmatpush.bf16.msra.mxu0 %v544
  %562 = vmatpush.bf16.msra.mxu0 %v543
  %563 = vmatpush.bf16.msra.mxu0 %v542
  %564 = vmatpush.bf16.msra.mxu0 %v541
  %565 = vmatmul.bf16.gmra.mxu0 %v456
  %v566 = vpop.f32.mrf.mxu0
  %v567 = vadd.f32 %v507, %v566
  %v568 = vpop.f32.mrf.mxu0
  %v569 = vadd.f32 %v507, %v568
  %570 = vmatmul.bf16.gmra.mxu0 %v457
  %v571 = vpop.f32.mrf.mxu0
  %v572 = vadd.f32 %v507, %v571
  %v573 = vpop.f32.mrf.mxu0
  %v574 = vadd.f32 %v507, %v573
  %575 = vmatmul.bf16.gmra.mxu0 %v458
  %v576 = vpop.f32.mrf.mxu0
  %v577 = vadd.f32 %v507, %v576
  %v578 = vpop.f32.mrf.mxu0
  %v579 = vadd.f32 %v507, %v578
  %580 = vmatmul.bf16.gmra.mxu0 %v459
  %v581 = vpop.f32.mrf.mxu0
  %v582 = vadd.f32 %v507, %v581
  %v583 = vpop.f32.mrf.mxu0
  %v584 = vadd.f32 %v507, %v583
  %585 = vmatmul.bf16.gmra.mxu0 %v460
  %v586 = vpop.f32.mrf.mxu0
  %v587 = vadd.f32 %v507, %v586
  %v588 = vpop.f32.mrf.mxu0
  %v589 = vadd.f32 %v507, %v588
  %590 = vmatmul.bf16.gmra.mxu0 %v461
  %v591 = vpop.f32.mrf.mxu0
  %v592 = vadd.f32 %v507, %v591
  %v593 = vpop.f32.mrf.mxu0
  %v594 = vadd.f32 %v507, %v593
  %595 = vmatmul.bf16.gmra.mxu0 %v462
  %v596 = vpop.f32.mrf.mxu0
  %v597 = vadd.f32 %v507, %v596
  %v598 = vpop.f32.mrf.mxu0
  %v599 = vadd.f32 %v507, %v598
  %600 = vmatmul.bf16.gmra.mxu0 %v463
  %v601 = vpop.f32.mrf.mxu0
  %v602 = vadd.f32 %v507, %v601
  %v603 = vpop.f32.mrf.mxu0
  %v604 = vadd.f32 %v507, %v603
  %605 = vmatmul.bf16.gmra.mxu0 %v464
  %v606 = vpop.f32.mrf.mxu0
  %v607 = vadd.f32 %v507, %v606
  %v608 = vpop.f32.mrf.mxu0
  %v609 = vadd.f32 %v507, %v608
  %610 = vmatmul.bf16.gmra.mxu0 %v465
  %v611 = vpop.f32.mrf.mxu0
  %v612 = vadd.f32 %v507, %v611
  %v613 = vpop.f32.mrf.mxu0
  %v614 = vadd.f32 %v507, %v613
  %615 = vmatmul.bf16.gmra.mxu0 %v466
  %v616 = vpop.f32.mrf.mxu0
  %v617 = vadd.f32 %v507, %v616
  %v618 = vpop.f32.mrf.mxu0
  %v619 = vadd.f32 %v507, %v618
  %620 = vmatmul.bf16.gmra.mxu0 %v467
  %v621 = vpop.f32.mrf.mxu0
  %v622 = vadd.f32 %v507, %v621
  %v623 = vpop.f32.mrf.mxu0
  %v624 = vadd.f32 %v507, %v623
  %625 = vmatmul.bf16.gmra.mxu0 %v468
  %v626 = vpop.f32.mrf.mxu0
  %v627 = vadd.f32 %v507, %v626
  %v628 = vpop.f32.mrf.mxu0
  %v629 = vadd.f32 %v507, %v628
  %630 = vmatmul.bf16.gmra.mxu0 %v469
  %v631 = vpop.f32.mrf.mxu0
  %v632 = vadd.f32 %v507, %v631
  %v633 = vpop.f32.mrf.mxu0
  %v634 = vadd.f32 %v507, %v633
  %635 = vmatmul.bf16.gmra.mxu0 %v470
  %v636 = vpop.f32.mrf.mxu0
  %v637 = vadd.f32 %v507, %v636
  %v638 = vpop.f32.mrf.mxu0
  %v639 = vadd.f32 %v507, %v638
  %640 = vmatmul.bf16.gmra.mxu0 %v471
  %v641 = vpop.f32.mrf.mxu0
  %v642 = vadd.f32 %v507, %v641
  %v643 = vpop.f32.mrf.mxu0
  %v644 = vadd.f32 %v507, %v643
  %645 = vmatmul.bf16.gmra.mxu0 %v472
  %v646 = vpop.f32.mrf.mxu0
  %v647 = vadd.f32 %v507, %v646
  %v648 = vpop.f32.mrf.mxu0
  %v649 = vadd.f32 %v507, %v648
  %650 = vmatmul.bf16.gmra.mxu0 %v473
  %v651 = vpop.f32.mrf.mxu0
  %v652 = vadd.f32 %v507, %v651
  %v653 = vpop.f32.mrf.mxu0
  %v654 = vadd.f32 %v507, %v653
  %655 = vmatmul.bf16.gmra.mxu0 %v474
  %v656 = vpop.f32.mrf.mxu0
  %v657 = vadd.f32 %v507, %v656
  %v658 = vpop.f32.mrf.mxu0
  %v659 = vadd.f32 %v507, %v658
  %660 = vmatmul.bf16.gmra.mxu0 %v475
  %v661 = vpop.f32.mrf.mxu0
  %v662 = vadd.f32 %v507, %v661
  %v663 = vpop.f32.mrf.mxu0
  %v664 = vadd.f32 %v507, %v663
  %665 = vmatmul.bf16.gmra.mxu0 %v476
  %v666 = vpop.f32.mrf.mxu0
  %v667 = vadd.f32 %v507, %v666
  %v668 = vpop.f32.mrf.mxu0
  %v669 = vadd.f32 %v507, %v668
  %670 = vmatmul.bf16.gmra.mxu0 %v477
  %v671 = vpop.f32.mrf.mxu0
  %v672 = vadd.f32 %v507, %v671
  %v673 = vpop.f32.mrf.mxu0
  %v674 = vadd.f32 %v507, %v673
  %675 = vmatmul.bf16.gmra.mxu0 %v478
  %v676 = vpop.f32.mrf.mxu0
  %v677 = vadd.f32 %v507, %v676
  %v678 = vpop.f32.mrf.mxu0
  %v679 = vadd.f32 %v507, %v678
  %680 = vmatmul.bf16.gmra.mxu0 %v479
  %v681 = vpop.f32.mrf.mxu0
  %v682 = vadd.f32 %v507, %v681
  %v683 = vpop.f32.mrf.mxu0
  %v684 = vadd.f32 %v507, %v683
  %685 = vmatmul.bf16.gmra.mxu0 %v480
  %v686 = vpop.f32.mrf.mxu0
  %v687 = vadd.f32 %v507, %v686
  %v688 = vpop.f32.mrf.mxu0
  %v689 = vadd.f32 %v507, %v688
  %690 = vmatmul.bf16.gmra.mxu0 %v481
  %v691 = vpop.f32.mrf.mxu0
  %v692 = vadd.f32 %v507, %v691
  %v693 = vpop.f32.mrf.mxu0
  %v694 = vadd.f32 %v507, %v693
  %695 = vmatmul.bf16.gmra.mxu0 %v482
  %v696 = vpop.f32.mrf.mxu0
  %v697 = vadd.f32 %v507, %v696
  %v698 = vpop.f32.mrf.mxu0
  %v699 = vadd.f32 %v507, %v698
  %700 = vmatmul.bf16.gmra.mxu0 %v483
  %v701 = vpop.f32.mrf.mxu0
  %v702 = vadd.f32 %v507, %v701
  %v703 = vpop.f32.mrf.mxu0
  %v704 = vadd.f32 %v507, %v703
  %705 = vmatmul.bf16.gmra.mxu0 %v484
  %v706 = vpop.f32.mrf.mxu0
  %v707 = vadd.f32 %v507, %v706
  %v708 = vpop.f32.mrf.mxu0
  %v709 = vadd.f32 %v507, %v708
  %710 = vmatmul.bf16.gmra.mxu0 %v485
  %v711 = vpop.f32.mrf.mxu0
  %v712 = vadd.f32 %v507, %v711
  %v713 = vpop.f32.mrf.mxu0
  %v714 = vadd.f32 %v507, %v713
  %715 = vmatmul.bf16.gmra.mxu0 %v486
  %v716 = vpop.f32.mrf.mxu0
  %v717 = vadd.f32 %v507, %v716
  %v718 = vpop.f32.mrf.mxu0
  %v719 = vadd.f32 %v507, %v718
  %720 = vmatmul.bf16.gmra.mxu0 %v487
  %v721 = vpop.f32.mrf.mxu0
  %v722 = vadd.f32 %v507, %v721
  %v723 = vpop.f32.mrf.mxu0
  %v724 = vadd.f32 %v507, %v723
  %725 = vdwg.mxu0
  %v726 = vmax.f32 %v567, 0.0
  %v727 = vmax.f32 %v569, 0.0
  %v728 = vmax.f32 %v572, 0.0
  %v729 = vmax.f32 %v574, 0.0
  %v730 = vmax.f32 %v577, 0.0
  %v731 = vmax.f32 %v579, 0.0
  %v732 = vmax.f32 %v582, 0.0
  %v733 = vmax.f32 %v584, 0.0
  %v734 = vmax.f32 %v587, 0.0
  %v735 = vmax.f32 %v589, 0.0
  %v736 = vmax.f32 %v592, 0.0
  %v737 = vmax.f32 %v594, 0.0
  %v738 = vmax.f32 %v597, 0.0
  %v739 = vmax.f32 %v599, 0.0
  %v740 = vmax.f32 %v602, 0.0
  %v741 = vmax.f32 %v604, 0.0
  %v742 = vmax.f32 %v607, 0.0
  %v743 = vmax.f32 %v609, 0.0
  %v744 = vmax.f32 %v612, 0.0
  %v745 = vmax.f32 %v614, 0.0
  %v746 = vmax.f32 %v617, 0.0
  %v747 = vmax.f32 %v619, 0.0
  %v748 = vmax.f32 %v622, 0.0
  %v749 = vmax.f32 %v624, 0.0
  %v750 = vmax.f32 %v627, 0.0
  %v751 = vmax.f32 %v629, 0.0
  %v752 = vmax.f32 %v632, 0.0
  %v753 = vmax.f32 %v634, 0.0
  %v754 = vmax.f32 %v637, 0.0
  %v755 = vmax.f32 %v639, 0.0
  %v756 = vmax.f32 %v642, 0.0
  %v757 = vmax.f32 %v644, 0.0
  %v758 = vmax.f32 %v647, 0.0
  %v759 = vmax.f32 %v649, 0.0
  %v760 = vmax.f32 %v652, 0.0
  %v761 = vmax.f32 %v654, 0.0
  %v762 = vmax.f32 %v657, 0.0
  %v763 = vmax.f32 %v659, 0.0
  %v764 = vmax.f32 %v662, 0.0
  %v765 = vmax.f32 %v664, 0.0
  %v766 = vmax.f32 %v667, 0.0
  %v767 = vmax.f32 %v669, 0.0
  %v768 = vmax.f32 %v672, 0.0
  %v769 = vmax.f32 %v674, 0.0
  %v770 = vmax.f32 %v677, 0.0
  %v771 = vmax.f32 %v679, 0.0
  %v772 = vmax.f32 %v682, 0.0
  %v773 = vmax.f32 %v684, 0.0
  %v774 = vmax.f32 %v687, 0.0
  %v775 = vmax.f32 %v689, 0.0
  %v776 = vmax.f32 %v692, 0.0
  %v777 = vmax.f32 %v694, 0.0
  %v778 = vmax.f32 %v697, 0.0
  %v779 = vmax.f32 %v699, 0.0
  %v780 = vmax.f32 %v702, 0.0
  %v781 = vmax.f32 %v704, 0.0
  %v782 = vmax.f32 %v707, 0.0
  %v783 = vmax.f32 %v709, 0.0
  %v784 = vmax.f32 %v712, 0.0
  %v785 = vmax.f32 %v714, 0.0
  %v786 = vmax.f32 %v717, 0.0
  %v787 = vmax.f32 %v719, 0.0
  %v788 = vmax.f32 %v722, 0.0
  %v789 = vmax.f32 %v724, 0.0
  %v790 = vpack.c.bf16 %v727, %v726
  %v791 = vpack.c.bf16 %v729, %v728
  %v792 = vpack.c.bf16 %v731, %v730
  %v793 = vpack.c.bf16 %v733, %v732
  %v794 = vpack.c.bf16 %v735, %v734
  %v795 = vpack.c.bf16 %v737, %v736
  %v796 = vpack.c.bf16 %v739, %v738
  %v797 = vpack.c.bf16 %v741, %v740
  %v798 = vpack.c.bf16 %v743, %v742
  %v799 = vpack.c.bf16 %v745, %v744
  %v800 = vpack.c.bf16 %v747, %v746
  %v801 = vpack.c.bf16 %v749, %v748
  %v802 = vpack.c.bf16 %v751, %v750
  %v803 = vpack.c.bf16 %v753, %v752
  %v804 = vpack.c.bf16 %v755, %v754
  %v805 = vpack.c.bf16 %v757, %v756
  %v806 = vpack.c.bf16 %v759, %v758
  %v807 = vpack.c.bf16 %v761, %v760
  %v808 = vpack.c.bf16 %v763, %v762
  %v809 = vpack.c.bf16 %v765, %v764
  %v810 = vpack.c.bf16 %v767, %v766
  %v811 = vpack.c.bf16 %v769, %v768
  %v812 = vpack.c.bf16 %v771, %v770
  %v813 = vpack.c.bf16 %v773, %v772
  %v814 = vpack.c.bf16 %v775, %v774
  %v815 = vpack.c.bf16 %v777, %v776
  %v816 = vpack.c.bf16 %v779, %v778
  %v817 = vpack.c.bf16 %v781, %v780
  %v818 = vpack.c.bf16 %v783, %v782
  %v819 = vpack.c.bf16 %v785, %v784
  %v820 = vpack.c.bf16 %v787, %v786
  %v821 = vpack.c.bf16 %v789, %v788
  %s822 = scalar_lea.vmem %s2, 64
  %v823 = vld [vmem:[%s822] sm:$0xf]
  %v824 = vld [vmem:[%s822 + $0x4] sm:$0xf]
  %v825 = vld [vmem:[%s822 + $0x8] sm:$0xf]
  %v826 = vld [vmem:[%s822 + $0xc] sm:$0xf]
  %v827 = vld [vmem:[%s822 + $0x10] sm:$0xf]
  %v828 = vld [vmem:[%s822 + $0x14] sm:$0xf]
  %v829 = vld [vmem:[%s822 + $0x18] sm:$0xf]
  %v830 = vld [vmem:[%s822 + $0x1c] sm:$0xf]
  %v831 = vld [vmem:[%s822 + $0x20] sm:$0xf]
  %v832 = vld [vmem:[%s822 + $0x24] sm:$0xf]
  %v833 = vld [vmem:[%s822 + $0x28] sm:$0xf]
  %v834 = vld [vmem:[%s822 + $0x2c] sm:$0xf]
  %v835 = vld [vmem:[%s822 + $0x30] sm:$0xf]
  %v836 = vld [vmem:[%s822 + $0x34] sm:$0xf]
  %v837 = vld [vmem:[%s822 + $0x38] sm:$0xf]
  %v838 = vld [vmem:[%s822 + $0x3c] sm:$0xf]
  %s839 = scalar_lea.vmem %s3, 2
  %v840 = vld [vmem:[%s839] sm:$0x1]
  %v842 = vperm.slane %v840, 0
  %v860 = vunpack.c.l.b16 %v823
  %v861 = vunpack.c.l.b16 %v824
  %v862 = vunpack.c.l.b16 %v825
  %v863 = vunpack.c.l.b16 %v826
  %v864 = vunpack.c.l.b16 %v827
  %v865 = vunpack.c.l.b16 %v828
  %v866 = vunpack.c.l.b16 %v829
  %v867 = vunpack.c.l.b16 %v830
  %v868 = vunpack.c.l.b16 %v831
  %v869 = vunpack.c.l.b16 %v832
  %v870 = vunpack.c.l.b16 %v833
  %v871 = vunpack.c.l.b16 %v834
  %v872 = vunpack.c.l.b16 %v835
  %v873 = vunpack.c.l.b16 %v836
  %v874 = vunpack.c.l.b16 %v837
  %v875 = vunpack.c.l.b16 %v838
  %v876 = vpack.c.b16 %v861, %v860
  %v877 = vpack.c.b16 %v863, %v862
  %v878 = vpack.c.b16 %v865, %v864
  %v879 = vpack.c.b16 %v867, %v866
  %v880 = vpack.c.b16 %v869, %v868
  %v881 = vpack.c.b16 %v871, %v870
  %v882 = vpack.c.b16 %v873, %v872
  %v883 = vpack.c.b16 %v875, %v874
  %892 = vmatpush.bf16.msra.mxu0 %v883
  %893 = vmatpush.bf16.msra.mxu0 %v882
  %894 = vmatpush.bf16.msra.mxu0 %v881
  %895 = vmatpush.bf16.msra.mxu0 %v880
  %896 = vmatpush.bf16.msra.mxu0 %v879
  %897 = vmatpush.bf16.msra.mxu0 %v878
  %898 = vmatpush.bf16.msra.mxu0 %v877
  %899 = vmatpush.bf16.msra.mxu0 %v876
  %900 = vmatmul.bf16.gmra.mxu0 %v790
  %v901 = vpop.f32.mrf.mxu0
  %v902 = vadd.f32 %v842, %v901
  %v903 = vpop.f32.mrf.mxu0
  %v904 = vadd.f32 %v842, %v903
  %905 = vmatmul.bf16.gmra.mxu0 %v791
  %v906 = vpop.f32.mrf.mxu0
  %v907 = vadd.f32 %v842, %v906
  %v908 = vpop.f32.mrf.mxu0
  %v909 = vadd.f32 %v842, %v908
  %910 = vmatmul.bf16.gmra.mxu0 %v792
  %v911 = vpop.f32.mrf.mxu0
  %v912 = vadd.f32 %v842, %v911
  %v913 = vpop.f32.mrf.mxu0
  %v914 = vadd.f32 %v842, %v913
  %915 = vmatmul.bf16.gmra.mxu0 %v793
  %v916 = vpop.f32.mrf.mxu0
  %v917 = vadd.f32 %v842, %v916
  %v918 = vpop.f32.mrf.mxu0
  %v919 = vadd.f32 %v842, %v918
  %920 = vmatmul.bf16.gmra.mxu0 %v794
  %v921 = vpop.f32.mrf.mxu0
  %v922 = vadd.f32 %v842, %v921
  %v923 = vpop.f32.mrf.mxu0
  %v924 = vadd.f32 %v842, %v923
  %925 = vmatmul.bf16.gmra.mxu0 %v795
  %v926 = vpop.f32.mrf.mxu0
  %v927 = vadd.f32 %v842, %v926
  %v928 = vpop.f32.mrf.mxu0
  %v929 = vadd.f32 %v842, %v928
  %930 = vmatmul.bf16.gmra.mxu0 %v796
  %v931 = vpop.f32.mrf.mxu0
  %v932 = vadd.f32 %v842, %v931
  %v933 = vpop.f32.mrf.mxu0
  %v934 = vadd.f32 %v842, %v933
  %935 = vmatmul.bf16.gmra.mxu0 %v797
  %v936 = vpop.f32.mrf.mxu0
  %v937 = vadd.f32 %v842, %v936
  %v938 = vpop.f32.mrf.mxu0
  %v939 = vadd.f32 %v842, %v938
  %940 = vmatmul.bf16.gmra.mxu0 %v798
  %v941 = vpop.f32.mrf.mxu0
  %v942 = vadd.f32 %v842, %v941
  %v943 = vpop.f32.mrf.mxu0
  %v944 = vadd.f32 %v842, %v943
  %945 = vmatmul.bf16.gmra.mxu0 %v799
  %v946 = vpop.f32.mrf.mxu0
  %v947 = vadd.f32 %v842, %v946
  %v948 = vpop.f32.mrf.mxu0
  %v949 = vadd.f32 %v842, %v948
  %950 = vmatmul.bf16.gmra.mxu0 %v800
  %v951 = vpop.f32.mrf.mxu0
  %v952 = vadd.f32 %v842, %v951
  %v953 = vpop.f32.mrf.mxu0
  %v954 = vadd.f32 %v842, %v953
  %955 = vmatmul.bf16.gmra.mxu0 %v801
  %v956 = vpop.f32.mrf.mxu0
  %v957 = vadd.f32 %v842, %v956
  %v958 = vpop.f32.mrf.mxu0
  %v959 = vadd.f32 %v842, %v958
  %960 = vmatmul.bf16.gmra.mxu0 %v802
  %v961 = vpop.f32.mrf.mxu0
  %v962 = vadd.f32 %v842, %v961
  %v963 = vpop.f32.mrf.mxu0
  %v964 = vadd.f32 %v842, %v963
  %965 = vmatmul.bf16.gmra.mxu0 %v803
  %v966 = vpop.f32.mrf.mxu0
  %v967 = vadd.f32 %v842, %v966
  %v968 = vpop.f32.mrf.mxu0
  %v969 = vadd.f32 %v842, %v968
  %970 = vmatmul.bf16.gmra.mxu0 %v804
  %v971 = vpop.f32.mrf.mxu0
  %v972 = vadd.f32 %v842, %v971
  %v973 = vpop.f32.mrf.mxu0
  %v974 = vadd.f32 %v842, %v973
  %975 = vmatmul.bf16.gmra.mxu0 %v805
  %v976 = vpop.f32.mrf.mxu0
  %v977 = vadd.f32 %v842, %v976
  %v978 = vpop.f32.mrf.mxu0
  %v979 = vadd.f32 %v842, %v978
  %980 = vmatmul.bf16.gmra.mxu0 %v806
  %v981 = vpop.f32.mrf.mxu0
  %v982 = vadd.f32 %v842, %v981
  %v983 = vpop.f32.mrf.mxu0
  %v984 = vadd.f32 %v842, %v983
  %985 = vmatmul.bf16.gmra.mxu0 %v807
  %v986 = vpop.f32.mrf.mxu0
  %v987 = vadd.f32 %v842, %v986
  %v988 = vpop.f32.mrf.mxu0
  %v989 = vadd.f32 %v842, %v988
  %990 = vmatmul.bf16.gmra.mxu0 %v808
  %v991 = vpop.f32.mrf.mxu0
  %v992 = vadd.f32 %v842, %v991
  %v993 = vpop.f32.mrf.mxu0
  %v994 = vadd.f32 %v842, %v993
  %995 = vmatmul.bf16.gmra.mxu0 %v809
  %v996 = vpop.f32.mrf.mxu0
  %v997 = vadd.f32 %v842, %v996
  %v998 = vpop.f32.mrf.mxu0
  %v999 = vadd.f32 %v842, %v998
  %1000 = vmatmul.bf16.gmra.mxu0 %v810
  %v1001 = vpop.f32.mrf.mxu0
  %v1002 = vadd.f32 %v842, %v1001
  %v1003 = vpop.f32.mrf.mxu0
  %v1004 = vadd.f32 %v842, %v1003
  %1005 = vmatmul.bf16.gmra.mxu0 %v811
  %v1006 = vpop.f32.mrf.mxu0
  %v1007 = vadd.f32 %v842, %v1006
  %v1008 = vpop.f32.mrf.mxu0
  %v1009 = vadd.f32 %v842, %v1008
  %1010 = vmatmul.bf16.gmra.mxu0 %v812
  %v1011 = vpop.f32.mrf.mxu0
  %v1012 = vadd.f32 %v842, %v1011
  %v1013 = vpop.f32.mrf.mxu0
  %v1014 = vadd.f32 %v842, %v1013
  %1015 = vmatmul.bf16.gmra.mxu0 %v813
  %v1016 = vpop.f32.mrf.mxu0
  %v1017 = vadd.f32 %v842, %v1016
  %v1018 = vpop.f32.mrf.mxu0
  %v1019 = vadd.f32 %v842, %v1018
  %1020 = vmatmul.bf16.gmra.mxu0 %v814
  %v1021 = vpop.f32.mrf.mxu0
  %v1022 = vadd.f32 %v842, %v1021
  %v1023 = vpop.f32.mrf.mxu0
  %v1024 = vadd.f32 %v842, %v1023
  %1025 = vmatmul.bf16.gmra.mxu0 %v815
  %v1026 = vpop.f32.mrf.mxu0
  %v1027 = vadd.f32 %v842, %v1026
  %v1028 = vpop.f32.mrf.mxu0
  %v1029 = vadd.f32 %v842, %v1028
  %1030 = vmatmul.bf16.gmra.mxu0 %v816
  %v1031 = vpop.f32.mrf.mxu0
  %v1032 = vadd.f32 %v842, %v1031
  %v1033 = vpop.f32.mrf.mxu0
  %v1034 = vadd.f32 %v842, %v1033
  %1035 = vmatmul.bf16.gmra.mxu0 %v817
  %v1036 = vpop.f32.mrf.mxu0
  %v1037 = vadd.f32 %v842, %v1036
  %v1038 = vpop.f32.mrf.mxu0
  %v1039 = vadd.f32 %v842, %v1038
  %1040 = vmatmul.bf16.gmra.mxu0 %v818
  %v1041 = vpop.f32.mrf.mxu0
  %v1042 = vadd.f32 %v842, %v1041
  %v1043 = vpop.f32.mrf.mxu0
  %v1044 = vadd.f32 %v842, %v1043
  %1045 = vmatmul.bf16.gmra.mxu0 %v819
  %v1046 = vpop.f32.mrf.mxu0
  %v1047 = vadd.f32 %v842, %v1046
  %v1048 = vpop.f32.mrf.mxu0
  %v1049 = vadd.f32 %v842, %v1048
  %1050 = vmatmul.bf16.gmra.mxu0 %v820
  %v1051 = vpop.f32.mrf.mxu0
  %v1052 = vadd.f32 %v842, %v1051
  %v1053 = vpop.f32.mrf.mxu0
  %v1054 = vadd.f32 %v842, %v1053
  %1055 = vmatmul.bf16.gmra.mxu0 %v821
  %v1056 = vpop.f32.mrf.mxu0
  %v1057 = vadd.f32 %v842, %v1056
  %v1058 = vpop.f32.mrf.mxu0
  %v1059 = vadd.f32 %v842, %v1058
  %1060 = vdwg.mxu0
  %v1061 = vtanh.pop %v902
  %v1062 = vtanh.pop %v904
  %v1063 = vtanh.pop %v907
  %v1064 = vtanh.pop %v909
  %v1065 = vtanh.pop %v912
  %v1066 = vtanh.pop %v914
  %v1067 = vtanh.pop %v917
  %v1068 = vtanh.pop %v919
  %v1069 = vtanh.pop %v922
  %v1070 = vtanh.pop %v924
  %v1071 = vtanh.pop %v927
  %v1072 = vtanh.pop %v929
  %v1073 = vtanh.pop %v932
  %v1074 = vtanh.pop %v934
  %v1075 = vtanh.pop %v937
  %v1076 = vtanh.pop %v939
  %v1077 = vtanh.pop %v942
  %v1078 = vtanh.pop %v944
  %v1079 = vtanh.pop %v947
  %v1080 = vtanh.pop %v949
  %v1081 = vtanh.pop %v952
  %v1082 = vtanh.pop %v954
  %v1083 = vtanh.pop %v957
  %v1084 = vtanh.pop %v959
  %v1085 = vtanh.pop %v962
  %v1086 = vtanh.pop %v964
  %v1087 = vtanh.pop %v967
  %v1088 = vtanh.pop %v969
  %v1089 = vtanh.pop %v972
  %v1090 = vtanh.pop %v974
  %v1091 = vtanh.pop %v977
  %v1092 = vtanh.pop %v979
  %v1093 = vtanh.pop %v982
  %v1094 = vtanh.pop %v984
  %v1095 = vtanh.pop %v987
  %v1096 = vtanh.pop %v989
  %v1097 = vtanh.pop %v992
  %v1098 = vtanh.pop %v994
  %v1099 = vtanh.pop %v997
  %v1100 = vtanh.pop %v999
  %v1101 = vtanh.pop %v1002
  %v1102 = vtanh.pop %v1004
  %v1103 = vtanh.pop %v1007
  %v1104 = vtanh.pop %v1009
  %v1105 = vtanh.pop %v1012
  %v1106 = vtanh.pop %v1014
  %v1107 = vtanh.pop %v1017
  %v1108 = vtanh.pop %v1019
  %v1109 = vtanh.pop %v1022
  %v1110 = vtanh.pop %v1024
  %v1111 = vtanh.pop %v1027
  %v1112 = vtanh.pop %v1029
  %v1113 = vtanh.pop %v1032
  %v1114 = vtanh.pop %v1034
  %v1115 = vtanh.pop %v1037
  %v1116 = vtanh.pop %v1039
  %v1117 = vtanh.pop %v1042
  %v1118 = vtanh.pop %v1044
  %v1119 = vtanh.pop %v1047
  %v1120 = vtanh.pop %v1049
  %v1121 = vtanh.pop %v1052
  %v1122 = vtanh.pop %v1054
  %v1123 = vtanh.pop %v1057
  %v1124 = vtanh.pop %v1059
  %v1125 = vpack.c.bf16 %v1061, %v1061
  %v1126 = vpack.c.bf16 %v1062, %v1062
  %v1127 = vpack.c.bf16 %v1063, %v1063
  %v1128 = vpack.c.bf16 %v1064, %v1064
  %v1129 = vpack.c.bf16 %v1065, %v1065
  %v1130 = vpack.c.bf16 %v1066, %v1066
  %v1131 = vpack.c.bf16 %v1067, %v1067
  %v1132 = vpack.c.bf16 %v1068, %v1068
  %v1133 = vpack.c.bf16 %v1069, %v1069
  %v1134 = vpack.c.bf16 %v1070, %v1070
  %v1135 = vpack.c.bf16 %v1071, %v1071
  %v1136 = vpack.c.bf16 %v1072, %v1072
  %v1137 = vpack.c.bf16 %v1073, %v1073
  %v1138 = vpack.c.bf16 %v1074, %v1074
  %v1139 = vpack.c.bf16 %v1075, %v1075
  %v1140 = vpack.c.bf16 %v1076, %v1076
  %v1141 = vpack.c.bf16 %v1077, %v1077
  %v1142 = vpack.c.bf16 %v1078, %v1078
  %v1143 = vpack.c.bf16 %v1079, %v1079
  %v1144 = vpack.c.bf16 %v1080, %v1080
  %v1145 = vpack.c.bf16 %v1081, %v1081
  %v1146 = vpack.c.bf16 %v1082, %v1082
  %v1147 = vpack.c.bf16 %v1083, %v1083
  %v1148 = vpack.c.bf16 %v1084, %v1084
  %v1149 = vpack.c.bf16 %v1085, %v1085
  %v1150 = vpack.c.bf16 %v1086, %v1086
  %v1151 = vpack.c.bf16 %v1087, %v1087
  %v1152 = vpack.c.bf16 %v1088, %v1088
  %v1153 = vpack.c.bf16 %v1089, %v1089
  %v1154 = vpack.c.bf16 %v1090, %v1090
  %v1155 = vpack.c.bf16 %v1091, %v1091
  %v1156 = vpack.c.bf16 %v1092, %v1092
  %v1157 = vpack.c.bf16 %v1093, %v1093
  %v1158 = vpack.c.bf16 %v1094, %v1094
  %v1159 = vpack.c.bf16 %v1095, %v1095
  %v1160 = vpack.c.bf16 %v1096, %v1096
  %v1161 = vpack.c.bf16 %v1097, %v1097
  %v1162 = vpack.c.bf16 %v1098, %v1098
  %v1163 = vpack.c.bf16 %v1099, %v1099
  %v1164 = vpack.c.bf16 %v1100, %v1100
  %v1165 = vpack.c.bf16 %v1101, %v1101
  %v1166 = vpack.c.bf16 %v1102, %v1102
  %v1167 = vpack.c.bf16 %v1103, %v1103
  %v1168 = vpack.c.bf16 %v1104, %v1104
  %v1169 = vpack.c.bf16 %v1105, %v1105
  %v1170 = vpack.c.bf16 %v1106, %v1106
  %v1171 = vpack.c.bf16 %v1107, %v1107
  %v1172 = vpack.c.bf16 %v1108, %v1108
  %v1173 = vpack.c.bf16 %v1109, %v1109
  %v1174 = vpack.c.bf16 %v1110, %v1110
  %v1175 = vpack.c.bf16 %v1111, %v1111
  %v1176 = vpack.c.bf16 %v1112, %v1112
  %v1177 = vpack.c.bf16 %v1113, %v1113
  %v1178 = vpack.c.bf16 %v1114, %v1114
  %v1179 = vpack.c.bf16 %v1115, %v1115
  %v1180 = vpack.c.bf16 %v1116, %v1116
  %v1181 = vpack.c.bf16 %v1117, %v1117
  %v1182 = vpack.c.bf16 %v1118, %v1118
  %v1183 = vpack.c.bf16 %v1119, %v1119
  %v1184 = vpack.c.bf16 %v1120, %v1120
  %v1185 = vpack.c.bf16 %v1121, %v1121
  %v1186 = vpack.c.bf16 %v1122, %v1122
  %v1187 = vpack.c.bf16 %v1123, %v1123
  %v1188 = vpack.c.bf16 %v1124, %v1124
  %1189 = vst [vmem:[%s4] sm:$0xf] %v1125
  %1190 = vst [vmem:[%s4 + $0x4] sm:$0xf] %v1126
  %1191 = vst [vmem:[%s4 + $0x8] sm:$0xf] %v1127
  %1192 = vst [vmem:[%s4 + $0xc] sm:$0xf] %v1128
  %1193 = vst [vmem:[%s4 + $0x10] sm:$0xf] %v1129
  %1194 = vst [vmem:[%s4 + $0x14] sm:$0xf] %v1130
  %1195 = vst [vmem:[%s4 + $0x18] sm:$0xf] %v1131
  %1196 = vst [vmem:[%s4 + $0x1c] sm:$0xf] %v1132
  %1197 = vst [vmem:[%s4 + $0x20] sm:$0xf] %v1133
  %1198 = vst [vmem:[%s4 + $0x24] sm:$0xf] %v1134
  %1199 = vst [vmem:[%s4 + $0x28] sm:$0xf] %v1135
  %1200 = vst [vmem:[%s4 + $0x2c] sm:$0xf] %v1136
  %1201 = vst [vmem:[%s4 + $0x30] sm:$0xf] %v1137
  %1202 = vst [vmem:[%s4 + $0x34] sm:$0xf] %v1138
  %1203 = vst [vmem:[%s4 + $0x38] sm:$0xf] %v1139
  %1204 = vst [vmem:[%s4 + $0x3c] sm:$0xf] %v1140
  %1205 = vst [vmem:[%s4 + $0x40] sm:$0xf] %v1141
  %1206 = vst [vmem:[%s4 + $0x44] sm:$0xf] %v1142
  %1207 = vst [vmem:[%s4 + $0x48] sm:$0xf] %v1143
  %1208 = vst [vmem:[%s4 + $0x4c] sm:$0xf] %v1144
  %1209 = vst [vmem:[%s4 + $0x50] sm:$0xf] %v1145
  %1210 = vst [vmem:[%s4 + $0x54] sm:$0xf] %v1146
  %1211 = vst [vmem:[%s4 + $0x58] sm:$0xf] %v1147
  %1212 = vst [vmem:[%s4 + $0x5c] sm:$0xf] %v1148
  %1213 = vst [vmem:[%s4 + $0x60] sm:$0xf] %v1149
  %1214 = vst [vmem:[%s4 + $0x64] sm:$0xf] %v1150
  %1215 = vst [vmem:[%s4 + $0x68] sm:$0xf] %v1151
  %1216 = vst [vmem:[%s4 + $0x6c] sm:$0xf] %v1152
  %1217 = vst [vmem:[%s4 + $0x70] sm:$0xf] %v1153
  %1218 = vst [vmem:[%s4 + $0x74] sm:$0xf] %v1154
  %1219 = vst [vmem:[%s4 + $0x78] sm:$0xf] %v1155
  %1220 = vst [vmem:[%s4 + $0x7c] sm:$0xf] %v1156
  %1221 = vst [vmem:[%s4 + $0x80] sm:$0xf] %v1157
  %1222 = vst [vmem:[%s4 + $0x84] sm:$0xf] %v1158
  %1223 = vst [vmem:[%s4 + $0x88] sm:$0xf] %v1159
  %1224 = vst [vmem:[%s4 + $0x8c] sm:$0xf] %v1160
  %1225 = vst [vmem:[%s4 + $0x90] sm:$0xf] %v1161
  %1226 = vst [vmem:[%s4 + $0x94] sm:$0xf] %v1162
  %1227 = vst [vmem:[%s4 + $0x98] sm:$0xf] %v1163
  %1228 = vst [vmem:[%s4 + $0x9c] sm:$0xf] %v1164
  %1229 = vst [vmem:[%s4 + $0xa0] sm:$0xf] %v1165
  %1230 = vst [vmem:[%s4 + $0xa4] sm:$0xf] %v1166
  %1231 = vst [vmem:[%s4 + $0xa8] sm:$0xf] %v1167
  %1232 = vst [vmem:[%s4 + $0xac] sm:$0xf] %v1168
  %1233 = vst [vmem:[%s4 + $0xb0] sm:$0xf] %v1169
  %1234 = vst [vmem:[%s4 + $0xb4] sm:$0xf] %v1170
  %1235 = vst [vmem:[%s4 + $0xb8] sm:$0xf] %v1171
  %1236 = vst [vmem:[%s4 + $0xbc] sm:$0xf] %v1172
  %1237 = vst [vmem:[%s4 + $0xc0] sm:$0xf] %v1173
  %1238 = vst [vmem:[%s4 + $0xc4] sm:$0xf] %v1174
  %1239 = vst [vmem:[%s4 + $0xc8] sm:$0xf] %v1175
  %1240 = vst [vmem:[%s4 + $0xcc] sm:$0xf] %v1176
  %1241 = vst [vmem:[%s4 + $0xd0] sm:$0xf] %v1177
  %1242 = vst [vmem:[%s4 + $0xd4] sm:$0xf] %v1178
  %1243 = vst [vmem:[%s4 + $0xd8] sm:$0xf] %v1179
  %1244 = vst [vmem:[%s4 + $0xdc] sm:$0xf] %v1180
  %1245 = vst [vmem:[%s4 + $0xe0] sm:$0xf] %v1181
  %1246 = vst [vmem:[%s4 + $0xe4] sm:$0xf] %v1182
  %1247 = vst [vmem:[%s4 + $0xe8] sm:$0xf] %v1183
  %1248 = vst [vmem:[%s4 + $0xec] sm:$0xf] %v1184
  %1249 = vst [vmem:[%s4 + $0xf0] sm:$0xf] %v1185
  %1250 = vst [vmem:[%s4 + $0xf4] sm:$0xf] %v1186
  %1251 = vst [vmem:[%s4 + $0xf8] sm:$0xf] %v1187
  %1252 = vst [vmem:[%s4 + $0xfc] sm:$0xf] %v1188
  // Predicated region
  $region18: #{_actor_forward_jit.1} parent=0 // pred_check
    _
  $region19: #{_actor_forward_jit.1} parent=0 // pred_check_branch
    %1254 = sbr.rel (0) target = $region21
  $region20: #{_actor_forward_jit.1} parent=0 // pred_region
    _
  $region21: #{_actor_forward_jit.1} parent=0 // pred_fallthru
    _
  // Predicated region
  $region22: #{_actor_forward_jit.1} parent=0 // pred_check
    _
  $region23: #{_actor_forward_jit.1} parent=0 // pred_check_branch
    %1256 = sbr.rel (0) target = $region25
  $region24: #{_actor_forward_jit.1} parent=0 // pred_region
    _
  $region25: #{_actor_forward_jit.1} parent=0 // pred_fallthru
    _

</llo_original>
